<compile_context>
chip_gen: v7x
topology: tpu7x:2x2x1
jax: 0.10.0
libtpu: 0.0.40
codegen_flags: <defaults>
</compile_context>

<pallas_src>
import functools

import jax
import jax.numpy as jnp
from jax import lax
from jax.experimental import pallas as pl
from jax.experimental.pallas import tpu as pltpu


def _iln_kernel(eps, inv_n, inv_nm1, x_ref, g_ref, b_ref, o_ref):
    # x_ref / o_ref: (1, C, Tt, F)     g_ref / b_ref: (1, C, 1, F)
    x = x_ref[...].astype(jnp.float32)

    # Per-(b, t) statistics over channel (axis 1) and frequency (axis 3).
    # Reductions are strictly per time-row: padded rows of a partial last tile
    # produce garbage that is masked on writeback (never mixed across rows).
    s = jnp.sum(jnp.sum(x, axis=1, keepdims=True), axis=3, keepdims=True)  # (1,1,Tt,1)
    mean = s * inv_n
    d = x - mean
    # Two-pass unbiased variance (block is VMEM-resident; extra pass is free).
    var = jnp.sum(jnp.sum(d * d, axis=1, keepdims=True), axis=3, keepdims=True) * inv_nm1
    std = jnp.sqrt(var)
    # Intentional module quirk: divide by sqrt(std + eps), NOT sqrt(var + eps).
    inv = lax.rsqrt(std + eps)                     # EUP; only on (1,1,Tt,1) stats

    g = g_ref[...].astype(jnp.float32)             # (1, C, 1, F)
    b = b_ref[...].astype(jnp.float32)
    o_ref[...] = (d * inv * g + b).astype(o_ref.dtype)


def instant_layer_norm_2d(x, gain, bias, eps=1e-05, t_tile=None):
    """x: (B, C, T, F).  gain/bias: (1, C, 1, 1) as in the nn.Module."""
    B, C, T, F = x.shape
    n = C * F
    itemsize = jnp.dtype(x.dtype).itemsize

    # Per-channel affine, pre-broadcast along F once (tiny) so the kernel only
    # needs a sublane broadcast along the time tile.
    g_row = jnp.broadcast_to(
        jnp.reshape(gain, (C, 1)).astype(jnp.float32), (C, F)).reshape(1, C, 1, F)
    b_row = jnp.broadcast_to(
        jnp.reshape(bias, (C, 1)).astype(jnp.float32), (C, F)).reshape(1, C, 1, F)

    # --- Tile sizing. VMEM accounting uses the physically padded tile sizes.
    f_pad = ((F + 127) // 128) * 128                  # lane padding
    sub = max(8, 32 // itemsize)                      # sublane pack: 8 f32 / 16 bf16
    bytes_per_t = C * f_pad * itemsize

    if t_tile is None:
        target_bytes = 8 << 20                        # ~8 MiB per block
        t_tile = max(sub, target_bytes // max(1, bytes_per_t))
    t_tile = int(t_tile)
    if B == 1:
        # Keep >= 2 grid steps so both v7x TensorCores get work on small inputs.
        t_tile = min(t_tile, max(sub, -(-T // 2)))
    if t_tile >= T:
        t_tile = T                                    # full-dim block is always legal
    else:
        t_tile = max(sub, (t_tile // sub) * sub)      # multiple of the sublane pack

    grid = (B, pl.cdiv(T, t_tile))

    # VMEM budget: 2x(in) + 2x(out) double-buffered blocks + params + slack.
    # Cap at 56 MiB: leaves headroom under v7x's 64 MiB physical VMEM and still
    # overrides v5e's 16 MiB scoped default.
    block_bytes = C * max(t_tile, sub) * f_pad * itemsize
    param_bytes = 2 * C * 8 * f_pad * 4
    needed = 4 * block_bytes + param_bytes + (8 << 20)
    vmem_limit = int(min(max(needed, 24 << 20), 56 << 20))

    kernel = functools.partial(
        _iln_kernel, float(eps), 1.0 / n, 1.0 / max(n - 1, 1))

    return pl.pallas_call(
        kernel,
        out_shape=jax.ShapeDtypeStruct((B, C, T, F), x.dtype),
        grid_spec=pltpu.PrefetchScalarGridSpec(
            num_scalar_prefetch=0,
            grid=grid,
            in_specs=[
                pl.BlockSpec((1, C, t_tile, F), lambda bi, ti: (bi, 0, ti, 0)),
                pl.BlockSpec((1, C, 1, F), lambda bi, ti: (0, 0, 0, 0)),
                pl.BlockSpec((1, C, 1, F), lambda bi, ti: (0, 0, 0, 0)),
            ],
            out_specs=pl.BlockSpec((1, C, t_tile, F), lambda bi, ti: (bi, 0, ti, 0)),
        ),
        compiler_params=pltpu.CompilerParams(
            dimension_semantics=("parallel", "parallel"),
            vmem_limit_bytes=vmem_limit,
        ),
        cost_estimate=pl.CostEstimate(
            flops=int(8 * B * C * T * F),
            transcendentals=int(2 * B * T),
            bytes_accessed=int(2 * B * C * T * F * itemsize),
        ),
    )(x, g_row, b_row)


def _reference(x, gain, bias, eps=1e-05):
    # Pure-JAX mirror of the PyTorch forward (for validation).
    C, F = x.shape[1], x.shape[3]
    mean = jnp.mean(x, axis=(1, 3), keepdims=True)
    var = jnp.sum((x - mean) ** 2, axis=(1, 3), keepdims=True) / (C * F - 1)
    std = jnp.sqrt(var)
    return (x - mean) / jnp.sqrt(std + eps) * gain + bias


if __name__ == "__main__":
    key = jax.random.PRNGKey(0)
    B, C, T, F = 2, 4, 16, 16  # (batch, num_features, time, freq)

    x = jax.random.normal(key, (B, C, T, F), dtype=jnp.float32)

    # Deterministic affine parameters (module init is ones/zeros; use slightly
    # non-trivial deterministic values so the affine path is exercised).
    gain = (1.0 + 0.1 * jnp.arange(C, dtype=jnp.float32)).reshape(1, C, 1, 1)
    bias = (0.01 * jnp.arange(C, dtype=jnp.float32)).reshape(1, C, 1, 1)

    out = instant_layer_norm_2d(x, gain, bias, eps=1e-05)
    out = jax.block_until_ready(out)

    ref = _reference(x, gain, bias, eps=1e-05)
    assert out.shape == (B, C, T, F)
    assert jnp.allclose(out, ref, atol=1e-5, rtol=1e-5), "mismatch vs reference"

    print("KERNEL_OK")
</pallas_src>

<mosaic_0001>
module attributes {stable_mosaic.version = 11 : i64} {
  func.func @_iln_kernel(%arg0: i32, %arg1: i32, %arg2: memref<1x4x16x16xf32, #tpu.memory_space<vmem>>, %arg3: memref<1x4x1x16xf32, #tpu.memory_space<vmem>>, %arg4: memref<1x4x1x16xf32, #tpu.memory_space<vmem>>, %arg5: memref<1x4x16x16xf32, #tpu.memory_space<vmem>>) attributes {dimension_semantics = [#tpu.dimension_semantics<parallel>, #tpu.dimension_semantics<parallel>], iteration_bounds = array<i64: 2, 1>, scalar_prefetch = 0 : i64, scratch_operands = 0 : i64, tpu.core_type = #tpu.core_type<tc>, window_params = [{transform_indices = @transform_0, window_bounds = array<i64: 1, 4, 16, 16>}, {pipeline_mode = #tpu.pipeline_mode<synchronous>, transform_indices = @transform_1, window_bounds = array<i64: 1, 4, 1, 16>}, {pipeline_mode = #tpu.pipeline_mode<synchronous>, transform_indices = @transform_2, window_bounds = array<i64: 1, 4, 1, 16>}, {transform_indices = @transform_3, window_bounds = array<i64: 1, 4, 16, 16>}]} {
    %c0 = arith.constant 0 : index
    %c0_0 = arith.constant 0 : index
    %c0_1 = arith.constant 0 : index
    %c0_2 = arith.constant 0 : index
    %0 = vector.load %arg2[%c0, %c0_0, %c0_1, %c0_2] : memref<1x4x16x16xf32, #tpu.memory_space<vmem>>, vector<1x4x16x16xf32>
    %cst = arith.constant dense<0.000000e+00> : vector<1x16x16xf32>
    %1 = vector.multi_reduction <add>, %0, %cst [1] : vector<1x4x16x16xf32> to vector<1x16x16xf32>
    %2 = vector.shape_cast %1 : vector<1x16x16xf32> to vector<1x1x16x16xf32>
    %cst_3 = arith.constant dense<0.000000e+00> : vector<1x1x16xf32>
    %3 = vector.multi_reduction <add>, %2, %cst_3 [3] : vector<1x1x16x16xf32> to vector<1x1x16xf32>
    %4 = vector.shape_cast %3 : vector<1x1x16xf32> to vector<1x1x16x1xf32>
    %cst_4 = arith.constant 1.562500e-02 : f32
    %5 = vector.broadcast %cst_4 : f32 to vector<1x1x16x1xf32>
    %6 = arith.mulf %4, %5 : vector<1x1x16x1xf32>
    %7 = vector.broadcast %6 : vector<1x1x16x1xf32> to vector<1x4x16x16xf32>
    %8 = arith.subf %0, %7 : vector<1x4x16x16xf32>
    %9 = arith.mulf %8, %8 : vector<1x4x16x16xf32>
    %cst_5 = arith.constant dense<0.000000e+00> : vector<1x16x16xf32>
    %10 = vector.multi_reduction <add>, %9, %cst_5 [1] : vector<1x4x16x16xf32> to vector<1x16x16xf32>
    %11 = vector.shape_cast %10 : vector<1x16x16xf32> to vector<1x1x16x16xf32>
    %cst_6 = arith.constant dense<0.000000e+00> : vector<1x1x16xf32>
    %12 = vector.multi_reduction <add>, %11, %cst_6 [3] : vector<1x1x16x16xf32> to vector<1x1x16xf32>
    %13 = vector.shape_cast %12 : vector<1x1x16xf32> to vector<1x1x16x1xf32>
    %cst_7 = arith.constant 0.0158730168 : f32
    %14 = vector.broadcast %cst_7 : f32 to vector<1x1x16x1xf32>
    %15 = arith.mulf %13, %14 : vector<1x1x16x1xf32>
    %16 = math.sqrt %15 : vector<1x1x16x1xf32>
    %cst_8 = arith.constant 9.99999974E-6 : f32
    %17 = vector.broadcast %cst_8 : f32 to vector<1x1x16x1xf32>
    %18 = arith.addf %16, %17 : vector<1x1x16x1xf32>
    %19 = math.rsqrt %18 : vector<1x1x16x1xf32>
    %c0_9 = arith.constant 0 : index
    %c0_10 = arith.constant 0 : index
    %c0_11 = arith.constant 0 : index
    %c0_12 = arith.constant 0 : index
    %20 = vector.load %arg3[%c0_9, %c0_10, %c0_11, %c0_12] : memref<1x4x1x16xf32, #tpu.memory_space<vmem>>, vector<1x4x1x16xf32>
    %c0_13 = arith.constant 0 : index
    %c0_14 = arith.constant 0 : index
    %c0_15 = arith.constant 0 : index
    %c0_16 = arith.constant 0 : index
    %21 = vector.load %arg4[%c0_13, %c0_14, %c0_15, %c0_16] : memref<1x4x1x16xf32, #tpu.memory_space<vmem>>, vector<1x4x1x16xf32>
    %22 = vector.broadcast %19 : vector<1x1x16x1xf32> to vector<1x4x16x16xf32>
    %23 = arith.mulf %8, %22 : vector<1x4x16x16xf32>
    %24 = vector.broadcast %20 : vector<1x4x1x16xf32> to vector<1x4x16x16xf32>
    %25 = arith.mulf %23, %24 : vector<1x4x16x16xf32>
    %26 = vector.broadcast %21 : vector<1x4x1x16xf32> to vector<1x4x16x16xf32>
    %27 = arith.addf %25, %26 : vector<1x4x16x16xf32>
    %c0_17 = arith.constant 0 : index
    %c0_18 = arith.constant 0 : index
    %c0_19 = arith.constant 0 : index
    %c0_20 = arith.constant 0 : index
    %28 = vector.load %arg5[%c0_17, %c0_18, %c0_19, %c0_20] : memref<1x4x16x16xf32, #tpu.memory_space<vmem>>, vector<1x4x16x16xf32>
    tpu.vector_store %arg5[%c0_17, %c0_18, %c0_19, %c0_20], %27 {strides = array<i32>} : memref<1x4x16x16xf32, #tpu.memory_space<vmem>>, vector<1x4x16x16xf32>,
    return
  }
  func.func @transform_0(%arg0: i32, %arg1: i32) -> (i32, i32, i32, i32) {
    %c0_i32 = arith.constant 0 : i32
    %c0_i32_0 = arith.constant 0 : i32
    %c0_i32_1 = arith.constant 0 : i32
    return %arg0, %c0_i32, %arg1, %c0_i32_0 : i32, i32, i32, i32
  }
  func.func @transform_1(%arg0: i32, %arg1: i32) -> (i32, i32, i32, i32) {
    %c0_i32 = arith.constant 0 : i32
    %c0_i32_0 = arith.constant 0 : i32
    %c0_i32_1 = arith.constant 0 : i32
    %c0_i32_2 = arith.constant 0 : i32
    %c0_i32_3 = arith.constant 0 : i32
    return %c0_i32, %c0_i32_0, %c0_i32_1, %c0_i32_2 : i32, i32, i32, i32
  }
  func.func @transform_2(%arg0: i32, %arg1: i32) -> (i32, i32, i32, i32) {
    %c0_i32 = arith.constant 0 : i32
    %c0_i32_0 = arith.constant 0 : i32
    %c0_i32_1 = arith.constant 0 : i32
    %c0_i32_2 = arith.constant 0 : i32
    %c0_i32_3 = arith.constant 0 : i32
    return %c0_i32, %c0_i32_0, %c0_i32_1, %c0_i32_2 : i32, i32, i32, i32
  }
  func.func @transform_3(%arg0: i32, %arg1: i32) -> (i32, i32, i32, i32) {
    %c0_i32 = arith.constant 0 : i32
    %c0_i32_0 = arith.constant 0 : i32
    %c0_i32_1 = arith.constant 0 : i32
    return %arg0, %c0_i32, %arg1, %c0_i32_0 : i32, i32, i32, i32
  }
}

</mosaic_0001>

<llo_original>
// kernel: tpu_custom_call.1
$region0: #{tpu_custom_call.1}
  #allocation0 [shape = 'u32[]', space=smem, size = 0x4, offset = 0x4, fixed_abs, tag = 'smem constant byte address 0x4 - core index']
  #allocation1 [shape = 'u32[144,128]{1,0:T(1,128)}', space=vmem, size = 0x12000, scoped, tag = 'internal scratch']
  %s0 = inlined_call_operand.hbm [shape: f32[2,4,16,16], index: 0, kind: input, shape index: {}]
  %s1 = inlined_call_operand.hbm [shape: f32[1,4,1,16], index: 1, kind: input, shape index: {}]
  %s2 = inlined_call_operand.vmem [shape: f32[1,4,1,16], index: 2, kind: input, shape index: {}]
  %s3 = inlined_call_operand.hbm [shape: f32[2,4,16,16], index: 3, kind: output, shape index: {}]
  %s4 = sld [smem:[#allocation0]]
  $region53: #{tpu_custom_call.1} parent=0
    _
  %s6 = ssub.s32 1, %s4
  %s7 = scalar_select 0, %s6, %s4
  $region1: #{tpu_custom_call.1} parent=0
    #allocation2 [shape = 'u8[65536]{0}', space=vmem, size = 0x10000, scoped, tag = 'input window, operand 0']
    #allocation3 [shape = 's32[2]{0}', space=sflag, size = 0x8, scoped, tag = 'scoped memory for tpu_custom_call.1']
    #allocation4 [shape = 's32[2]{0}', space=sflag, size = 0x8, scoped, tag = 'scoped memory for tpu_custom_call.1']
    #allocation5 [shape = 'u8[2048]{0}', space=vmem, size = 0x800, scoped, tag = 'input window, operand 1, single buffered']
    #allocation6 [shape = 's32[1]{0}', space=sflag, size = 0x4, scoped, tag = 'scoped memory for tpu_custom_call.1']
    #allocation7 [shape = 'u8[65536]{0}', space=vmem, size = 0x10000, scoped, tag = 'output window, operand 0']
    %8 = vsyncpa [#allocation3], 0
    %s9 = scalar_lea.sflag [#allocation3], 1
    %10 = vsyncpa %s9, 0
    %11 = vsyncpa [#allocation6], 0
    %12 = vsyncpa [#allocation4], 0
    %s13 = scalar_lea.sflag [#allocation4], 1
    %14 = vsyncpa %s13, 0
    loop: start=0, step=1, limit=4
    $region2: #{tpu_custom_call.1} parent=1 // loop_pre_header
      _
    $region3: #{tpu_custom_call.1} parent=1 // loop_header
      %s16 = sphi 0, %s20
      %p17 = scmp.ge.s32.totalorder %s16, 4
      %s23 = sphi 0, %s35
      %s24 = sphi 0, %s31
      %s25 = sphi 0, %s23
      %s26 = sphi 0, %s24
      %s27 = sphi 0, %s25
      %s28 = sphi 0, %s26
      %s40 = sphi 0, %s42
      %s43 = sphi 0, %s40
      %s44 = sphi 0, %s43
      %s60 = sphi 0, %s44
      %s64 = sphi 0, %s64
      %s66 = sphi 0, %s64
      %s67 = sphi 0, %s66
      %s81 = sphi 0, %s67
      %s85 = sphi 0, %s85
      %s87 = sphi 0, %s85
      %s88 = sphi 0, %s87
      %s102 = sphi 0, %s88
      %s110 = sphi 0, %s112
      %s113 = sphi 0, %s110
      %s114 = sphi 0, %s113
      %s130 = sphi 0, %s114
    $region4: #{tpu_custom_call.1} parent=1 // loop_header_branch
      %19 = sbr.rel (%p17) target = $region8
    $region5: #{tpu_custom_call.1} parent=1 // loop_body
      %s21 = ssub.s32 %s16, 1
      %s22 = ssub.s32 %s16, 2
      %s29 = sadd.s32 1, %s24
      %p30 = scmp.ge.s32.totalorder %s29, 1
      %s31 = scalar_select %p30, 0, %s29
      %s32 = sadd.s32 1, %s23
      %s33 = scalar_select %p30, %s32, %s23
      %p34 = scmp.ge.s32.totalorder %s33, 2
      %s35 = scalar_select %p34, 0, %s33
      %s36 = ssub.s32 %s23, %s35
      %s37 = ssub.s32 %s24, %s31
      %s38 = sor.u32 %s36, %s37
      %p39 = scmp.eq.s32.totalorder %s38, 0
      %s41 = sadd.s32 %s40, 1
      %s42 = scalar_select %p39, %s40, %s41
      %p45 = pneg %p39
      %p46 = scmp.eq.s32.totalorder %s16, 1
      %p47 = por %p45, %p46
      %p48 = scmp.ne.s32.totalorder %s40, %s43
      %p49 = scmp.eq.s32.totalorder %s16, 0
      %p50 = por %p48, %p49
      %p51 = scmp.ne.s32.totalorder %s40, %s43
      %p52 = scmp.eq.s32.totalorder %s21, 1
      %p53 = por %p51, %p52
      %p54 = scmp.ne.s32.totalorder %s43, %s44
      %p55 = scmp.eq.s32.totalorder %s21, 0
      %p56 = por %p54, %p55
      %p57 = scmp.ne.s32.totalorder %s43, %s44
      %p58 = scmp.eq.s32.totalorder %s22, 1
      %p59 = por %p57, %p58
      %p61 = scmp.ne.s32.totalorder %s44, %s60
      %p62 = scmp.eq.s32.totalorder %s22, 0
      %p63 = por %p61, %p62
      %s65 = sadd.s32 %s64, 1
      %p68 = scmp.eq.s32.totalorder %s16, 1
      %p69 = scmp.ne.s32.totalorder %s64, %s66
      %p70 = scmp.eq.s32.totalorder %s16, 0
      %p71 = por %p69, %p70
      %p72 = scmp.ne.s32.totalorder %s64, %s66
      %p73 = scmp.eq.s32.totalorder %s21, 1
      %p74 = por %p72, %p73
      %p75 = scmp.ne.s32.totalorder %s66, %s67
      %p76 = scmp.eq.s32.totalorder %s21, 0
      %p77 = por %p75, %p76
      %p78 = scmp.ne.s32.totalorder %s66, %s67
      %p79 = scmp.eq.s32.totalorder %s22, 1
      %p80 = por %p78, %p79
      %p82 = scmp.ne.s32.totalorder %s67, %s81
      %p83 = scmp.eq.s32.totalorder %s22, 0
      %p84 = por %p82, %p83
      %s86 = sadd.s32 %s85, 1
      %p89 = scmp.eq.s32.totalorder %s16, 1
      %p90 = scmp.ne.s32.totalorder %s85, %s87
      %p91 = scmp.eq.s32.totalorder %s16, 0
      %p92 = por %p90, %p91
      %p93 = scmp.ne.s32.totalorder %s85, %s87
      %p94 = scmp.eq.s32.totalorder %s21, 1
      %p95 = por %p93, %p94
      %p96 = scmp.ne.s32.totalorder %s87, %s88
      %p97 = scmp.eq.s32.totalorder %s21, 0
      %p98 = por %p96, %p97
      %p99 = scmp.ne.s32.totalorder %s87, %s88
      %p100 = scmp.eq.s32.totalorder %s22, 1
      %p101 = por %p99, %p100
      %p103 = scmp.ne.s32.totalorder %s88, %s102
      %p104 = scmp.eq.s32.totalorder %s22, 0
      %p105 = por %p103, %p104
      %s106 = ssub.s32 %s23, %s35
      %s107 = ssub.s32 %s24, %s31
      %s108 = sor.u32 %s106, %s107
      %p109 = scmp.eq.s32.totalorder %s108, 0
      %s111 = sadd.s32 %s110, 1
      %s112 = scalar_select %p109, %s110, %s111
      %p115 = pneg %p109
      %p116 = scmp.eq.s32.totalorder %s16, 1
      %p117 = por %p115, %p116
      %p118 = scmp.ne.s32.totalorder %s110, %s113
      %p119 = scmp.eq.s32.totalorder %s16, 0
      %p120 = por %p118, %p119
      %p121 = scmp.ne.s32.totalorder %s110, %s113
      %p122 = scmp.eq.s32.totalorder %s21, 1
      %p123 = por %p121, %p122
      %p124 = scmp.ne.s32.totalorder %s113, %s114
      %p125 = scmp.eq.s32.totalorder %s21, 0
      %p126 = por %p124, %p125
      %p127 = scmp.ne.s32.totalorder %s113, %s114
      %p128 = scmp.eq.s32.totalorder %s22, 1
      %p129 = por %p127, %p128
      %p131 = scmp.ne.s32.totalorder %s114, %s130
      %p132 = scmp.eq.s32.totalorder %s22, 0
      %p133 = por %p131, %p132
      %p134 = scmp.le.s32.totalorder 1, %s16
      %p135 = scmp.lt.s32.totalorder %s16, 3
      %p136 = pnand %p134, %p135
      %p137 = pneg %p136
      // Predicated region
      $region9: #{tpu_custom_call.1} parent=5 // pred_check
        _
      $region10: #{tpu_custom_call.1} parent=5 // pred_check_branch
        %139 = sbr.rel (%p136) target = $region12
      $region11: #{tpu_custom_call.1} parent=5 // pred_region
        %s140 = ssub.s32 %s16, 1
        // Predicated region
        $region13: #{tpu_custom_call.1} parent=11 // pred_check
          %p141 = pneg %p77
        $region14: #{tpu_custom_call.1} parent=11 // pred_check_branch
          %143 = sbr.rel (%p141) target = $region16
        $region15: #{tpu_custom_call.1} parent=11 // pred_region
          %s145 = ssub.s32 64, 64
          %146 = vsyncadd [#allocation6], %s145
          %s147 = sshll.u32 [#allocation5], 4
          %s148 = int_to_ptr.vmem [resolvable:$true] %s147
          %153 = dma.hbm_to_vmem [thread:$0]  %s1, 64, %s148, [#allocation6], 16, 16, 1
        $region16: #{tpu_custom_call.1} parent=11 // pred_fallthru
          _
        // Predicated region
        $region17: #{tpu_custom_call.1} parent=11 // pred_check
          %p154 = pneg %p98
        $region18: #{tpu_custom_call.1} parent=11 // pred_check_branch
          %156 = sbr.rel (%p154) target = $region20
        $region19: #{tpu_custom_call.1} parent=11 // pred_region
          _
        $region20: #{tpu_custom_call.1} parent=11 // pred_fallthru
          _
      $region12: #{tpu_custom_call.1} parent=5 // pred_fallthru
        _
      %p157 = scmp.lt.s32.totalorder %s16, 2
      // Predicated region
      $region21: #{tpu_custom_call.1} parent=5 // pred_check
        %p158 = pneg %p157
      $region22: #{tpu_custom_call.1} parent=5 // pred_check_branch
        %160 = sbr.rel (%p158) target = $region24
      $region23: #{tpu_custom_call.1} parent=5 // pred_region
        // Predicated region
        $region25: #{tpu_custom_call.1} parent=23 // pred_check
          %p161 = pneg %p50
        $region26: #{tpu_custom_call.1} parent=23 // pred_check_branch
          %163 = sbr.rel (%p161) target = $region28
        $region27: #{tpu_custom_call.1} parent=23 // pred_region
          %s164 = sand.u32 %s40, 1
          %s165 = scalar_lea.sflag [#allocation3], %s164
          %s166 = sand.u32 %s40, 1
          %s167 = smul.addr %s166, 64
          %s168 = scalar_lea.vmem [#allocation2], %s167
          %s169 = smul.u32 2, %s24
          %s171 = ssub.s32 1024, 1024
          %172 = vsyncadd %s165, %s171
          %s173 = smul.addr %s23, 8
          %s174 = sadd.s32 %s169, %s173
          %s175 = smul.addr %s174, 128
          %s176 = scalar_lea.hbm %s0, %s175
          %s177 = sshll.u32 %s168, 4
          %s178 = int_to_ptr.vmem [resolvable:$true] %s177
          %183 = dma.hbm_to_vmem [thread:$0]  %s176, 1024, %s178, %s165, 128, 128, 8
        $region28: #{tpu_custom_call.1} parent=23 // pred_fallthru
          _
      $region24: #{tpu_custom_call.1} parent=5 // pred_fallthru
        _
      %p184 = scmp.le.s32.totalorder 1, %s16
      %p185 = scmp.lt.s32.totalorder %s16, 3
      %p186 = pnand %p184, %p185
      %p187 = pneg %p186
      // Predicated region
      $region29: #{tpu_custom_call.1} parent=5 // pred_check
        _
      $region30: #{tpu_custom_call.1} parent=5 // pred_check_branch
        %189 = sbr.rel (%p186) target = $region32
      $region31: #{tpu_custom_call.1} parent=5 // pred_region
        %s190 = ssub.s32 %s16, 1
        %s191 = sand.u32 %s43, 1
        %s192 = scalar_lea.sflag [#allocation3], %s191
        %s193 = sand.u32 %s43, 1
        %s194 = smul.addr %s193, 64
        %s195 = scalar_lea.vmem [#allocation2], %s194
        // Predicated region
        $region33: #{tpu_custom_call.1} parent=31 // pred_check
          %p196 = pneg %p56
        $region34: #{tpu_custom_call.1} parent=31 // pred_check_branch
          %198 = sbr.rel (%p196) target = $region36
        $region35: #{tpu_custom_call.1} parent=31 // pred_region
          %199 = dma.done %s192, 1024
        $region36: #{tpu_custom_call.1} parent=31 // pred_fallthru
          _
        // Predicated region
        $region37: #{tpu_custom_call.1} parent=31 // pred_check
          %p200 = pneg %p77
        $region38: #{tpu_custom_call.1} parent=31 // pred_check_branch
          %202 = sbr.rel (%p200) target = $region40
        $region39: #{tpu_custom_call.1} parent=31 // pred_region
          %203 = dma.done [#allocation6], 64
        $region40: #{tpu_custom_call.1} parent=31 // pred_fallthru
          _
        %s204 = sand.u32 %s43, 1
        %s205 = scalar_lea.sflag [#allocation3], %s204
        %s206 = sand.u32 %s43, 1
        %s207 = smul.addr %s206, 64
        %s208 = scalar_lea.vmem [#allocation2], %s207
        %p209 = pneg %p56
        %p210 = pneg %p53
        %p211 = pneg %p77
        %p212 = pneg %p74
        %p213 = pneg %p98
        %p214 = pneg %p95
        %p215 = pneg %p126
        %p216 = pneg %p123
        %s217 = sand.u32 %s113, 1
        %s218 = scalar_lea.sflag [#allocation4], %s217
        %s219 = sand.u32 %s113, 1
        %s220 = smul.addr %s219, 64
        %s221 = scalar_lea.vmem [#allocation7], %s220
        %s222 = smul.u32 2, %s26
        %s223 = smul.u32 2, %s26
        %v224 = vld [vmem:[%s195] sm:$0xff]
        %v225 = vld [vmem:[%s195 + $0x8] sm:$0xff]
        %v226 = vld [vmem:[%s195 + $0x10] sm:$0xff]
        %v227 = vld [vmem:[%s195 + $0x18] sm:$0xff]
        %v228 = vld [vmem:[%s195 + $0x20] sm:$0xff]
        %v229 = vld [vmem:[%s195 + $0x28] sm:$0xff]
        %v230 = vld [vmem:[%s195 + $0x30] sm:$0xff]
        %v231 = vld [vmem:[%s195 + $0x38] sm:$0xff]
        %vm232 = vcmask 130048
        %v233 = vsel %vm232, %v224, 0.0
        %v234 = vsel %vm232, %v226, 0.0
        %v235 = vadd.f32 %v233, %v234
        %v236 = vsel %vm232, %v228, 0.0
        %v237 = vadd.f32 %v235, %v236
        %v238 = vsel %vm232, %v230, 0.0
        %v239 = vadd.f32 %v237, %v238
        %v240 = vsel %vm232, %v225, 0.0
        %v241 = vsel %vm232, %v227, 0.0
        %v242 = vadd.f32 %v240, %v241
        %v243 = vsel %vm232, %v229, 0.0
        %v244 = vadd.f32 %v242, %v243
        %v245 = vsel %vm232, %v231, 0.0
        %v246 = vadd.f32 %v244, %v245
        %v247 = vsel %vm232, %v239, 0.0
        %248 = vadd.xlane.f32.xlu0 %v247
        %v249 = vpop.xlane.xlu0 %248
        %v250 = vsel %vm232, %v246, 0.0
        %251 = vadd.xlane.f32.xlu0 %v250
        %v252 = vpop.xlane.xlu0 %251
        %v253 = vmul.f32 %v249, 0.015625
        %v254 = vmul.f32 %v252, 0.015625
        %v255 = vsub.f32 %v224, %v253
        %v256 = vsub.f32 %v225, %v254
        %v257 = vsub.f32 %v226, %v253
        %v258 = vsub.f32 %v227, %v254
        %v259 = vsub.f32 %v228, %v253
        %v260 = vsub.f32 %v229, %v254
        %v261 = vsub.f32 %v230, %v253
        %v262 = vsub.f32 %v231, %v254
        %v263 = vmul.f32 %v255, %v255
        %v264 = vmul.f32 %v256, %v256
        %v265 = vmul.f32 %v257, %v257
        %v266 = vmul.f32 %v258, %v258
        %v267 = vmul.f32 %v259, %v259
        %v268 = vmul.f32 %v260, %v260
        %v269 = vmul.f32 %v261, %v261
        %v270 = vmul.f32 %v262, %v262
        %v271 = vsel %vm232, %v263, 0.0
        %v272 = vsel %vm232, %v265, 0.0
        %v273 = vadd.f32 %v271, %v272
        %v274 = vsel %vm232, %v267, 0.0
        %v275 = vadd.f32 %v273, %v274
        %v276 = vsel %vm232, %v269, 0.0
        %v277 = vadd.f32 %v275, %v276
        %v278 = vsel %vm232, %v264, 0.0
        %v279 = vsel %vm232, %v266, 0.0
        %v280 = vadd.f32 %v278, %v279
        %v281 = vsel %vm232, %v268, 0.0
        %v282 = vadd.f32 %v280, %v281
        %v283 = vsel %vm232, %v270, 0.0
        %v284 = vadd.f32 %v282, %v283
        %v285 = vsel %vm232, %v277, 0.0
        %286 = vadd.xlane.f32.xlu0 %v285
        %v287 = vpop.xlane.xlu0 %286
        %v288 = vsel %vm232, %v284, 0.0
        %289 = vadd.xlane.f32.xlu0 %v288
        %v290 = vpop.xlane.xlu0 %289
        %v291 = vmul.f32 %v287, 0.015873017
        %v292 = vmul.f32 %v290, 0.015873017
        %v293 = vrsqrt.pop %v291
        %v294 = vmul.f32 %v291, %v293
        %vm295 = vcmp.eq.f32.partialorder %v291, inf
        %v296 = vsel %vm295, %v291, %v294
        %vm297 = vcmp.eq.f32.partialorder %v291, 0.0
        %v298 = vand.u32 %v291, 2147483648
        %v299 = vsel %vm297, %v298, %v296
        %v300 = vrsqrt.pop %v292
        %v301 = vmul.f32 %v292, %v300
        %vm302 = vcmp.eq.f32.partialorder %v292, inf
        %v303 = vsel %vm302, %v292, %v301
        %vm304 = vcmp.eq.f32.partialorder %v292, 0.0
        %v305 = vand.u32 %v292, 2147483648
        %v306 = vsel %vm304, %v305, %v303
        %v307 = vadd.f32 %v299, 1e-05
        %v308 = vadd.f32 %v306, 1e-05
        %v309 = vrsqrt.pop %v307
        %v310 = vrsqrt.pop %v308
        %v311 = vld [vmem:[#allocation5] sm:$0x1]
        %v312 = vld [vmem:[#allocation5 + $0x1] sm:$0x1]
        %v313 = vld [vmem:[#allocation5 + $0x2] sm:$0x1]
        %v314 = vld [vmem:[#allocation5 + $0x3] sm:$0x1]
        %v315 = vld [vmem:[%s2] sm:$0x1]
        %v316 = vld [vmem:[%s2 + $0x1] sm:$0x1]
        %v317 = vld [vmem:[%s2 + $0x2] sm:$0x1]
        %v318 = vld [vmem:[%s2 + $0x3] sm:$0x1]
        %v319 = vmul.f32 %v255, %v309
        %v320 = vmul.f32 %v256, %v310
        %v321 = vmul.f32 %v257, %v309
        %v322 = vmul.f32 %v258, %v310
        %v323 = vmul.f32 %v259, %v309
        %v324 = vmul.f32 %v260, %v310
        %v325 = vmul.f32 %v261, %v309
        %v326 = vmul.f32 %v262, %v310
        %v331 = vlaneseq
        %v332 = vshrl.u32 %v331, 7
        %v333 = vsub.s32 0, %v332
        %v334 = vrot.slane %v311, %v333
        %v335 = vlaneseq
        %v336 = vshrl.u32 %v335, 7
        %v337 = vsub.s32 0, %v336
        %v338 = vrot.slane %v312, %v337
        %v339 = vlaneseq
        %v340 = vshrl.u32 %v339, 7
        %v341 = vsub.s32 0, %v340
        %v342 = vrot.slane %v313, %v341
        %v343 = vlaneseq
        %v344 = vshrl.u32 %v343, 7
        %v345 = vsub.s32 0, %v344
        %v346 = vrot.slane %v314, %v345
        %v351 = vmul.f32 %v319, %v334
        %v352 = vmul.f32 %v320, %v334
        %v353 = vmul.f32 %v321, %v338
        %v354 = vmul.f32 %v322, %v338
        %v355 = vmul.f32 %v323, %v342
        %v356 = vmul.f32 %v324, %v342
        %v357 = vmul.f32 %v325, %v346
        %v358 = vmul.f32 %v326, %v346
        %v363 = vlaneseq
        %v364 = vshrl.u32 %v363, 7
        %v365 = vsub.s32 0, %v364
        %v366 = vrot.slane %v315, %v365
        %v367 = vlaneseq
        %v368 = vshrl.u32 %v367, 7
        %v369 = vsub.s32 0, %v368
        %v370 = vrot.slane %v316, %v369
        %v371 = vlaneseq
        %v372 = vshrl.u32 %v371, 7
        %v373 = vsub.s32 0, %v372
        %v374 = vrot.slane %v317, %v373
        %v375 = vlaneseq
        %v376 = vshrl.u32 %v375, 7
        %v377 = vsub.s32 0, %v376
        %v378 = vrot.slane %v318, %v377
        %v383 = vadd.f32 %v351, %v366
        %v384 = vadd.f32 %v352, %v366
        %v385 = vadd.f32 %v353, %v370
        %v386 = vadd.f32 %v354, %v370
        %v387 = vadd.f32 %v355, %v374
        %v388 = vadd.f32 %v356, %v374
        %v389 = vadd.f32 %v357, %v378
        %v390 = vadd.f32 %v358, %v378
        %391 = vst.msk [vmem:[%s221] sm:$0xff] %vm232, %v383
        %392 = vst.msk [vmem:[%s221 + $0x8] sm:$0xff] %vm232, %v384
        %393 = vst.msk [vmem:[%s221 + $0x10] sm:$0xff] %vm232, %v385
        %394 = vst.msk [vmem:[%s221 + $0x18] sm:$0xff] %vm232, %v386
        %395 = vst.msk [vmem:[%s221 + $0x20] sm:$0xff] %vm232, %v387
        %396 = vst.msk [vmem:[%s221 + $0x28] sm:$0xff] %vm232, %v388
        %397 = vst.msk [vmem:[%s221 + $0x30] sm:$0xff] %vm232, %v389
        %398 = vst.msk [vmem:[%s221 + $0x38] sm:$0xff] %vm232, %v390
        %s399 = sand.u32 %s113, 1
        %s400 = scalar_lea.sflag [#allocation4], %s399
        %s401 = sand.u32 %s113, 1
        %s402 = smul.addr %s401, 64
        %s403 = scalar_lea.vmem [#allocation7], %s402
        // Predicated region
        $region41: #{tpu_custom_call.1} parent=31 // pred_check
          %p404 = pneg %p123
        $region42: #{tpu_custom_call.1} parent=31 // pred_check_branch
          %406 = sbr.rel (%p404) target = $region44
        $region43: #{tpu_custom_call.1} parent=31 // pred_region
          %s407 = smul.u32 2, %s26
          %s409 = ssub.s32 1024, 1024
          %410 = vsyncadd %s400, %s409
          %s411 = smul.addr %s25, 8
          %s412 = sadd.s32 %s407, %s411
          %s413 = smul.addr %s412, 128
          %s414 = scalar_lea.hbm %s3, %s413
          %s415 = sshll.u32 %s403, 4
          %s416 = int_to_ptr.vmem [resolvable:$true] %s415
          %421 = dma.vmem_to_hbm [thread:$0]  %s416, 1024, %s414, %s400, 128, 128, 8
        $region44: #{tpu_custom_call.1} parent=31 // pred_fallthru
          _
      $region32: #{tpu_custom_call.1} parent=5 // pred_fallthru
        _
      %p422 = scmp.le.s32.totalorder 2, %s16
      // Predicated region
      $region45: #{tpu_custom_call.1} parent=5 // pred_check
        %p423 = pneg %p422
      $region46: #{tpu_custom_call.1} parent=5 // pred_check_branch
        %425 = sbr.rel (%p423) target = $region48
      $region47: #{tpu_custom_call.1} parent=5 // pred_region
        %s426 = ssub.s32 %s16, 2
        // Predicated region
        $region49: #{tpu_custom_call.1} parent=47 // pred_check
          %p427 = pneg %p129
        $region50: #{tpu_custom_call.1} parent=47 // pred_check_branch
          %429 = sbr.rel (%p427) target = $region52
        $region51: #{tpu_custom_call.1} parent=47 // pred_region
          %s430 = sand.u32 %s114, 1
          %s431 = scalar_lea.sflag [#allocation4], %s430
          %s432 = sand.u32 %s114, 1
          %s433 = smul.addr %s432, 64
          %s434 = scalar_lea.vmem [#allocation7], %s433
          %435 = dma.done %s431, 1024
        $region52: #{tpu_custom_call.1} parent=47 // pred_fallthru
          _
      $region48: #{tpu_custom_call.1} parent=5 // pred_fallthru
        _
    $region6: #{tpu_custom_call.1} parent=1 // loop_footer
      %s20 = sadd.s32 1, %s16
    $region7: #{tpu_custom_call.1} parent=1 // loop_footer_branch
      %15 = sbr.rel target = $region3
    $region8: #{tpu_custom_call.1} parent=1 // loop_exit
      _
    %436 = vsyncpa [#allocation3], 1
    %s437 = scalar_lea.sflag [#allocation3], 1
    %438 = vsyncpa %s437, 1
    %439 = vsyncpa [#allocation6], 1
    %440 = vsyncpa [#allocation4], 1
    %s441 = scalar_lea.sflag [#allocation4], 1
    %442 = vsyncpa %s441, 1

</llo_original>
